<compile_context>
chip_gen: v7x
topology: tpu7x:2x2x1
jax: 0.10.0
libtpu: 0.0.40
codegen_flags: <defaults>
</compile_context>

<pallas_src>
import functools

import jax
import jax.numpy as jnp
from jax.experimental import pallas as pl
from jax.experimental.pallas import tpu as pltpu

_EPS = 1e-6                      # matches torch.nn.functional.normalize eps
_LANE = 128
_SUB = 16                        # sublane granularity (bf16-safe: min tile (16, 128))
_TS_MAX = 1024                   # max sublane-rows per grid step (v7x VMEM cap)
_VMEM_LIMIT = 48 * 1024 * 1024   # raise scoped VMEM: needed on v5e (16 MiB default),
                                 # comfortable on v7x (64 MiB physical)


def _round_up(a, b):
    return ((a + b - 1) // b) * b


def _fast_pow(x, p):
    """x ** p. Integer p -> exact repeated squaring (VALU only); else exp/log."""
    ip = int(p)
    if float(ip) == float(p) and 0 < ip <= 512:
        result = None
        base = x
        e = ip
        while e:
            if e & 1:
                result = base if result is None else result * base
            e >>= 1
            if e:
                base = base * base
        return result
    return jnp.exp(p * jnp.log(jnp.maximum(x, 1e-30)))


def _phong_kernel(px_ref, py_ref, pz_ref, nx_ref, ny_ref, nz_ref,
                  tr_ref, tg_ref, tb_ref, m_ref, o_ref, *,
                  light_loc, amb_rgb, dif_rgb, spec_rgb, shininess,
                  cam_pos, bg_rgb, eps):
    """Per-pixel Phong lighting + hard RGB blend on a (TS, 128) pixel tile.

    Inputs are channel-major (pixel-on-lane) 2-D tiles:
      px/py/pz, nx/ny/nz : f32  world position / normal components
      tr/tg/tb, m        : bf16 (or f32) texel RGB and validity mask
    o_ref: (3, TS, 128) f32 rows R, G, B (alpha appended in the wrapper).
    """
    px = px_ref[...]
    py = py_ref[...]
    pz = pz_ref[...]
    nx = nx_ref[...]
    ny = ny_ref[...]
    nz = nz_ref[...]
    tex = (tr_ref[...].astype(jnp.float32),
           tg_ref[...].astype(jnp.float32),
           tb_ref[...].astype(jnp.float32))
    valid = m_ref[...] > 0

    eps2 = eps * eps

    # Direction to the point light, normalized (F.normalize semantics:
    # 1/max(||v||, eps) == rsqrt(max(||v||^2, eps^2))).
    lx = light_loc[0] - px
    ly = light_loc[1] - py
    lz = light_loc[2] - pz
    l_inv = jax.lax.rsqrt(jnp.maximum(lx * lx + ly * ly + lz * lz, eps2))
    lx = lx * l_inv
    ly = ly * l_inv
    lz = lz * l_inv

    n_inv = jax.lax.rsqrt(jnp.maximum(nx * nx + ny * ny + nz * nz, eps2))
    nx = nx * n_inv
    ny = ny * n_inv
    nz = nz * n_inv

    cos = nx * lx + ny * ly + nz * lz
    dif_angle = jnp.maximum(cos, 0.0)

    # Specular term.
    vx = cam_pos[0] - px
    vy = cam_pos[1] - py
    vz = cam_pos[2] - pz
    v_inv = jax.lax.rsqrt(jnp.maximum(vx * vx + vy * vy + vz * vz, eps2))
    vx = vx * v_inv
    vy = vy * v_inv
    vz = vz * v_inv

    two_cos = 2.0 * cos
    rx = two_cos * nx - lx
    ry = two_cos * ny - ly
    rz = two_cos * nz - lz
    spec_mask = (cos > 0.0).astype(jnp.float32)
    salpha = jnp.maximum(vx * rx + vy * ry + vz * rz, 0.0) * spec_mask
    spec_pow = _fast_pow(salpha, shininess)

    for c in range(3):
        shaded = (amb_rgb[c] + dif_rgb[c] * dif_angle) * tex[c] + spec_rgb[c] * spec_pow
        o_ref[c] = jnp.where(valid, shaded, jnp.float32(bg_rgb[c]))


def _interpolate_top_face_channels(verts, faces, verts_normals, pix_to_face,
                                   bary_coords):
    """interpolate_face_attributes for the K=0 fragment, channel-major outputs.

    Returns (pos_xyz, nrm_xyz, valid) where pos_xyz / nrm_xyz are tuples of
    three (N, H, W) arrays (so downstream layout packing fuses into these
    gather/reduce fusions instead of requiring a separate repack pass).
    """
    pix0 = pix_to_face[..., 0].astype(jnp.int32)                 # (N, H, W)
    valid = pix0 >= 0
    fidx = jnp.maximum(pix0, 0)
    face_vidx = faces[fidx]                                      # (N, H, W, 3)
    fverts = verts[face_vidx]                                    # (N, H, W, 3, 3)
    fnorms = verts_normals[face_vidx]                            # (N, H, W, 3, 3)
    b0 = jnp.where(valid[..., None], bary_coords[..., 0, :], 0.0)  # (N, H, W, 3)
    pos = tuple(jnp.sum(b0 * fverts[..., c], axis=-1) for c in range(3))
    nrm = tuple(jnp.sum(b0 * fnorms[..., c], axis=-1) for c in range(3))
    return pos, nrm, valid


def hard_phong_shader(verts, faces, verts_normals, pix_to_face, bary_coords,
                      texels, *,
                      light_location=(0.0, 1.0, 0.0),
                      light_ambient_color=(0.5, 0.5, 0.5),
                      light_diffuse_color=(0.3, 0.3, 0.3),
                      light_specular_color=(0.2, 0.2, 0.2),
                      mat_ambient_color=(1.0, 1.0, 1.0),
                      mat_diffuse_color=(1.0, 1.0, 1.0),
                      mat_specular_color=(1.0, 1.0, 1.0),
                      shininess=64.0,
                      camera_position=(0.0, 0.0, 5.0),
                      background_color=(1.0, 1.0, 1.0),
                      texels_in_bf16=True):
    """Pallas implementation of HardPhongShader.forward.

    verts:         (V, 3)  world-space vertex positions
    faces:         (F, 3)  int vertex indices
    verts_normals: (V, 3)  per-vertex normals
    pix_to_face:   (N, H, W, K)     int, -1 for empty slots
    bary_coords:   (N, H, W, K, 3)  barycentric coords
    texels:        (N, H, W, K, 3)  sampled texture RGB (sample_textures output)
    returns:       (N, H, W, 4)     RGBA image
    """
    N, H, W, K = pix_to_face.shape
    P = N * H * W

    verts = verts.astype(jnp.float32)
    verts_normals = verts_normals.astype(jnp.float32)
    bary_coords = bary_coords.astype(jnp.float32)

    pos, nrm, valid = _interpolate_top_face_channels(
        verts, faces, verts_normals, pix_to_face, bary_coords)

    # bf16 for texels/mask cuts HBM traffic ~15%; mask (0/1) is exact in bf16,
    # texel rounding is <= ~0.4% relative.  Set texels_in_bf16=False for
    # bit-faithful f32 texel handling.
    tex_dtype = jnp.bfloat16 if texels_in_bf16 else jnp.float32

    # --- Tile selection -----------------------------------------------------
    Pr = -(-P // _LANE)                      # rows of 128 pixels
    Pr_min = _round_up(Pr, _SUB)
    # Prefer >= 2 grid steps when there is enough work (v7x megacore), capped
    # at _TS_MAX sublane-rows (VMEM budget on v7x); last-tile padding <= 1 tile.
    TS = min(_TS_MAX, max(_SUB, _round_up(-(-Pr_min // 2), _SUB)))
    Pr_pad = _round_up(Pr_min, TS)
    P_pad = Pr_pad * _LANE
    grid = (Pr_pad // TS,)

    def to_lanes(x, dtype):
        # Channel-major, pixel-on-lane packing.  Each channel is written once,
        # directly in its final (Pr_pad, 128) layout — no separate
        # stack -> pad -> reshape repacking pass over the full slab.
        x = x.reshape(P).astype(dtype)
        x = jnp.pad(x, (0, P_pad - P))
        return x.reshape(Pr_pad, _LANE)

    channel_inputs = (
        [to_lanes(c, jnp.float32) for c in pos]
        + [to_lanes(c, jnp.float32) for c in nrm]
        + [to_lanes(texels[..., 0, c], tex_dtype) for c in range(3)]
        + [to_lanes(valid, tex_dtype)]
    )

    # Pre-multiply material x light colors into compile-time constants.
    amb_rgb = tuple(float(a) * float(b)
                    for a, b in zip(mat_ambient_color, light_ambient_color))
    dif_rgb = tuple(float(a) * float(b)
                    for a, b in zip(mat_diffuse_color, light_diffuse_color))
    spec_rgb = tuple(float(a) * float(b)
                     for a, b in zip(mat_specular_color, light_specular_color))

    kern = functools.partial(
        _phong_kernel,
        light_loc=tuple(float(v) for v in light_location),
        amb_rgb=amb_rgb, dif_rgb=dif_rgb, spec_rgb=spec_rgb,
        shininess=float(shininess),
        cam_pos=tuple(float(v) for v in camera_position),
        bg_rgb=tuple(float(v) for v in background_color),
        eps=_EPS)

    out = pl.pallas_call(
        kern,
        out_shape=jax.ShapeDtypeStruct((3, Pr_pad, _LANE), jnp.float32),
        grid=grid,
        in_specs=[pl.BlockSpec((TS, _LANE), lambda i: (i, 0))
                  for _ in range(len(channel_inputs))],
        out_specs=pl.BlockSpec((3, TS, _LANE), lambda i: (0, i, 0)),
        compiler_params=pltpu.CompilerParams(
            dimension_semantics=("parallel",),
            vmem_limit_bytes=_VMEM_LIMIT),
    )(*channel_inputs)

    rgb = out.reshape(3, P_pad)[:, :P].reshape(3, N, H, W)
    rgb = jnp.transpose(rgb, (1, 2, 3, 0))                       # (N, H, W, 3)
    alpha = jnp.ones((N, H, W, 1), jnp.float32)                  # constant A=1
    return jnp.concatenate([rgb, alpha], axis=-1)                # (N, H, W, 4)


def _reference_hard_phong(verts, faces, verts_normals, pix_to_face, bary_coords,
                          texels, *, light_location, light_ambient_color,
                          light_diffuse_color, light_specular_color,
                          mat_ambient_color, mat_diffuse_color,
                          mat_specular_color, shininess, camera_position,
                          background_color):
    """Pure-JAX reference: phong_shading (K=0) + hard_rgb_blend."""
    verts = verts.astype(jnp.float32)
    verts_normals = verts_normals.astype(jnp.float32)
    bary_coords = bary_coords.astype(jnp.float32)

    pos, nrm, valid = _interpolate_top_face_channels(
        verts, faces, verts_normals, pix_to_face, bary_coords)
    points = jnp.stack(pos, axis=-1)
    normals = jnp.stack(nrm, axis=-1)
    tex = texels[..., 0, :].astype(jnp.float32)

    eps2 = _EPS * _EPS

    def _norm(v):
        ss = jnp.sum(v * v, axis=-1, keepdims=True)
        return v * jax.lax.rsqrt(jnp.maximum(ss, eps2))

    L = jnp.asarray(light_location, jnp.float32)
    C = jnp.asarray(camera_position, jnp.float32)
    dirn = _norm(L - points)
    nrmv = _norm(normals)
    cos = jnp.sum(nrmv * dirn, axis=-1, keepdims=True)
    dif_angle = jnp.maximum(cos, 0.0)
    spec_mask = (cos > 0.0).astype(jnp.float32)
    view = _norm(C - points)
    reflect = -dirn + 2.0 * cos * nrmv
    salpha = jnp.maximum(jnp.sum(view * reflect, axis=-1, keepdims=True), 0.0) * spec_mask
    spec_pow = _fast_pow(salpha, float(shininess))

    amb = (jnp.asarray(mat_ambient_color, jnp.float32)
           * jnp.asarray(light_ambient_color, jnp.float32))
    dif = (jnp.asarray(mat_diffuse_color, jnp.float32)
           * jnp.asarray(light_diffuse_color, jnp.float32))
    spc = (jnp.asarray(mat_specular_color, jnp.float32)
           * jnp.asarray(light_specular_color, jnp.float32))
    colors = (amb + dif * dif_angle) * tex + spc * spec_pow

    bg = jnp.asarray(background_color, jnp.float32)
    rgb = jnp.where(valid[..., None], colors, bg)
    alpha = jnp.ones(rgb.shape[:-1] + (1,), jnp.float32)
    return jnp.concatenate([rgb, alpha], axis=-1)


if __name__ == "__main__":
    key = jax.random.PRNGKey(0)
    k0, k1, k2, k3, k4, k5 = jax.random.split(key, 6)

    # Small but representative shapes: batch=2, 16x16 image, K=4 faces/pixel,
    # a tiny mesh of 32 verts / 20 faces, RGB texels.
    N, H, W, K = 2, 16, 16, 4
    V, F = 32, 20

    verts = jax.random.uniform(k0, (V, 3), jnp.float32, minval=-1.0, maxval=1.0)
    faces = jax.random.randint(k1, (F, 3), 0, V, jnp.int32)
    verts_normals = jax.random.uniform(k2, (V, 3), jnp.float32,
                                       minval=-1.0, maxval=1.0)
    pix_to_face = jax.random.randint(k3, (N, H, W, K), -1, F, jnp.int32)
    bary_coords = jax.random.uniform(k4, (N, H, W, K, 3), jnp.float32)
    bary_coords = bary_coords / jnp.sum(bary_coords, axis=-1, keepdims=True)
    texels = jax.random.uniform(k5, (N, H, W, K, 3), jnp.float32)
    # Pre-round texels to bf16 so the kernel's bf16 texel transport is lossless
    # for this test and the f32 reference matches to f32 rounding.
    texels = texels.astype(jnp.bfloat16).astype(jnp.float32)

    params = dict(
        light_location=(0.0, 1.0, 0.0),
        light_ambient_color=(0.5, 0.5, 0.5),
        light_diffuse_color=(0.3, 0.3, 0.3),
        light_specular_color=(0.2, 0.2, 0.2),
        mat_ambient_color=(1.0, 1.0, 1.0),
        mat_diffuse_color=(1.0, 1.0, 1.0),
        mat_specular_color=(1.0, 1.0, 1.0),
        shininess=64.0,
        camera_position=(0.0, 0.0, 5.0),
        background_color=(1.0, 1.0, 1.0),
    )

    shader = jax.jit(functools.partial(hard_phong_shader, **params))
    out = jax.block_until_ready(
        shader(verts, faces, verts_normals, pix_to_face, bary_coords, texels))

    ref = jax.block_until_ready(
        _reference_hard_phong(verts, faces, verts_normals, pix_to_face,
                              bary_coords, texels, **params))

    assert out.shape == (N, H, W, 4), out.shape
    assert jnp.allclose(out, ref, rtol=1e-4, atol=1e-4), \
        float(jnp.max(jnp.abs(out - ref)))

    print("KERNEL_OK")
</pallas_src>

<mosaic_0001>
module attributes {stable_mosaic.version = 11 : i64} {
  func.func @_phong_kernel(%arg0: i32, %arg1: memref<16x128xf32, #tpu.memory_space<vmem>>, %arg2: memref<16x128xf32, #tpu.memory_space<vmem>>, %arg3: memref<16x128xf32, #tpu.memory_space<vmem>>, %arg4: memref<16x128xf32, #tpu.memory_space<vmem>>, %arg5: memref<16x128xf32, #tpu.memory_space<vmem>>, %arg6: memref<16x128xf32, #tpu.memory_space<vmem>>, %arg7: memref<16x128xbf16, #tpu.memory_space<vmem>>, %arg8: memref<16x128xbf16, #tpu.memory_space<vmem>>, %arg9: memref<16x128xbf16, #tpu.memory_space<vmem>>, %arg10: memref<16x128xbf16, #tpu.memory_space<vmem>>, %arg11: memref<3x16x128xf32, #tpu.memory_space<vmem>>) attributes {dimension_semantics = [#tpu.dimension_semantics<parallel>], iteration_bounds = array<i64: 1>, scalar_prefetch = 0 : i64, scratch_operands = 0 : i64, tpu.core_type = #tpu.core_type<tc>, window_params = [{transform_indices = @transform_0, window_bounds = array<i64: 16, 128>}, {transform_indices = @transform_1, window_bounds = array<i64: 16, 128>}, {transform_indices = @transform_2, window_bounds = array<i64: 16, 128>}, {transform_indices = @transform_3, window_bounds = array<i64: 16, 128>}, {transform_indices = @transform_4, window_bounds = array<i64: 16, 128>}, {transform_indices = @transform_5, window_bounds = array<i64: 16, 128>}, {transform_indices = @transform_6, window_bounds = array<i64: 16, 128>}, {transform_indices = @transform_7, window_bounds = array<i64: 16, 128>}, {transform_indices = @transform_8, window_bounds = array<i64: 16, 128>}, {transform_indices = @transform_9, window_bounds = array<i64: 16, 128>}, {transform_indices = @transform_10, window_bounds = array<i64: 3, 16, 128>}]} {
    %c0 = arith.constant 0 : index
    %c0_0 = arith.constant 0 : index
    %0 = vector.load %arg1[%c0, %c0_0] : memref<16x128xf32, #tpu.memory_space<vmem>>, vector<16x128xf32>
    %c0_1 = arith.constant 0 : index
    %c0_2 = arith.constant 0 : index
    %1 = vector.load %arg2[%c0_1, %c0_2] : memref<16x128xf32, #tpu.memory_space<vmem>>, vector<16x128xf32>
    %c0_3 = arith.constant 0 : index
    %c0_4 = arith.constant 0 : index
    %2 = vector.load %arg3[%c0_3, %c0_4] : memref<16x128xf32, #tpu.memory_space<vmem>>, vector<16x128xf32>
    %c0_5 = arith.constant 0 : index
    %c0_6 = arith.constant 0 : index
    %3 = vector.load %arg4[%c0_5, %c0_6] : memref<16x128xf32, #tpu.memory_space<vmem>>, vector<16x128xf32>
    %c0_7 = arith.constant 0 : index
    %c0_8 = arith.constant 0 : index
    %4 = vector.load %arg5[%c0_7, %c0_8] : memref<16x128xf32, #tpu.memory_space<vmem>>, vector<16x128xf32>
    %c0_9 = arith.constant 0 : index
    %c0_10 = arith.constant 0 : index
    %5 = vector.load %arg6[%c0_9, %c0_10] : memref<16x128xf32, #tpu.memory_space<vmem>>, vector<16x128xf32>
    %c0_11 = arith.constant 0 : index
    %c0_12 = arith.constant 0 : index
    %6 = vector.load %arg7[%c0_11, %c0_12] : memref<16x128xbf16, #tpu.memory_space<vmem>>, vector<16x128xbf16>
    %7 = arith.extf %6 : vector<16x128xbf16> to vector<16x128xf32>
    %c0_13 = arith.constant 0 : index
    %c0_14 = arith.constant 0 : index
    %8 = vector.load %arg8[%c0_13, %c0_14] : memref<16x128xbf16, #tpu.memory_space<vmem>>, vector<16x128xbf16>
    %9 = arith.extf %8 : vector<16x128xbf16> to vector<16x128xf32>
    %c0_15 = arith.constant 0 : index
    %c0_16 = arith.constant 0 : index
    %10 = vector.load %arg9[%c0_15, %c0_16] : memref<16x128xbf16, #tpu.memory_space<vmem>>, vector<16x128xbf16>
    %11 = arith.extf %10 : vector<16x128xbf16> to vector<16x128xf32>
    %c0_17 = arith.constant 0 : index
    %c0_18 = arith.constant 0 : index
    %12 = vector.load %arg10[%c0_17, %c0_18] : memref<16x128xbf16, #tpu.memory_space<vmem>>, vector<16x128xbf16>
    %cst = arith.constant 0.000000e+00 : bf16
    %13 = vector.broadcast %cst : bf16 to vector<16x128xbf16>
    %14 = arith.cmpf ogt, %12, %13 : vector<16x128xbf16>
    %cst_19 = arith.constant 0.000000e+00 : f32
    %15 = vector.broadcast %cst_19 : f32 to vector<16x128xf32>
    %16 = arith.subf %15, %0 : vector<16x128xf32>
    %cst_20 = arith.constant 1.000000e+00 : f32
    %17 = vector.broadcast %cst_20 : f32 to vector<16x128xf32>
    %18 = arith.subf %17, %1 : vector<16x128xf32>
    %cst_21 = arith.constant 0.000000e+00 : f32
    %19 = vector.broadcast %cst_21 : f32 to vector<16x128xf32>
    %20 = arith.subf %19, %2 : vector<16x128xf32>
    %21 = arith.mulf %16, %16 : vector<16x128xf32>
    %22 = arith.mulf %18, %18 : vector<16x128xf32>
    %23 = arith.addf %21, %22 : vector<16x128xf32>
    %24 = arith.mulf %20, %20 : vector<16x128xf32>
    %25 = arith.addf %23, %24 : vector<16x128xf32>
    %cst_22 = arith.constant 9.99999996E-13 : f32
    %26 = vector.broadcast %cst_22 : f32 to vector<16x128xf32>
    %27 = arith.maximumf %25, %26 : vector<16x128xf32>
    %28 = math.rsqrt %27 : vector<16x128xf32>
    %29 = arith.mulf %16, %28 : vector<16x128xf32>
    %30 = arith.mulf %18, %28 : vector<16x128xf32>
    %31 = arith.mulf %20, %28 : vector<16x128xf32>
    %32 = arith.mulf %3, %3 : vector<16x128xf32>
    %33 = arith.mulf %4, %4 : vector<16x128xf32>
    %34 = arith.addf %32, %33 : vector<16x128xf32>
    %35 = arith.mulf %5, %5 : vector<16x128xf32>
    %36 = arith.addf %34, %35 : vector<16x128xf32>
    %cst_23 = arith.constant 9.99999996E-13 : f32
    %37 = vector.broadcast %cst_23 : f32 to vector<16x128xf32>
    %38 = arith.maximumf %36, %37 : vector<16x128xf32>
    %39 = math.rsqrt %38 : vector<16x128xf32>
    %40 = arith.mulf %3, %39 : vector<16x128xf32>
    %41 = arith.mulf %4, %39 : vector<16x128xf32>
    %42 = arith.mulf %5, %39 : vector<16x128xf32>
    %43 = arith.mulf %40, %29 : vector<16x128xf32>
    %44 = arith.mulf %41, %30 : vector<16x128xf32>
    %45 = arith.addf %43, %44 : vector<16x128xf32>
    %46 = arith.mulf %42, %31 : vector<16x128xf32>
    %47 = arith.addf %45, %46 : vector<16x128xf32>
    %cst_24 = arith.constant 0.000000e+00 : f32
    %48 = vector.broadcast %cst_24 : f32 to vector<16x128xf32>
    %49 = arith.maximumf %47, %48 : vector<16x128xf32>
    %cst_25 = arith.constant 0.000000e+00 : f32
    %50 = vector.broadcast %cst_25 : f32 to vector<16x128xf32>
    %51 = arith.subf %50, %0 : vector<16x128xf32>
    %cst_26 = arith.constant 0.000000e+00 : f32
    %52 = vector.broadcast %cst_26 : f32 to vector<16x128xf32>
    %53 = arith.subf %52, %1 : vector<16x128xf32>
    %cst_27 = arith.constant 5.000000e+00 : f32
    %54 = vector.broadcast %cst_27 : f32 to vector<16x128xf32>
    %55 = arith.subf %54, %2 : vector<16x128xf32>
    %56 = arith.mulf %51, %51 : vector<16x128xf32>
    %57 = arith.mulf %53, %53 : vector<16x128xf32>
    %58 = arith.addf %56, %57 : vector<16x128xf32>
    %59 = arith.mulf %55, %55 : vector<16x128xf32>
    %60 = arith.addf %58, %59 : vector<16x128xf32>
    %cst_28 = arith.constant 9.99999996E-13 : f32
    %61 = vector.broadcast %cst_28 : f32 to vector<16x128xf32>
    %62 = arith.maximumf %60, %61 : vector<16x128xf32>
    %63 = math.rsqrt %62 : vector<16x128xf32>
    %64 = arith.mulf %51, %63 : vector<16x128xf32>
    %65 = arith.mulf %53, %63 : vector<16x128xf32>
    %66 = arith.mulf %55, %63 : vector<16x128xf32>
    %cst_29 = arith.constant 2.000000e+00 : f32
    %67 = vector.broadcast %cst_29 : f32 to vector<16x128xf32>
    %68 = arith.mulf %67, %47 : vector<16x128xf32>
    %69 = arith.mulf %68, %40 : vector<16x128xf32>
    %70 = arith.subf %69, %29 : vector<16x128xf32>
    %71 = arith.mulf %68, %41 : vector<16x128xf32>
    %72 = arith.subf %71, %30 : vector<16x128xf32>
    %73 = arith.mulf %68, %42 : vector<16x128xf32>
    %74 = arith.subf %73, %31 : vector<16x128xf32>
    %cst_30 = arith.constant 0.000000e+00 : f32
    %75 = vector.broadcast %cst_30 : f32 to vector<16x128xf32>
    %76 = arith.cmpf ogt, %47, %75 : vector<16x128xf32>
    %77 = arith.extui %76 : vector<16x128xi1> to vector<16x128xi32>
    %78 = arith.sitofp %77 : vector<16x128xi32> to vector<16x128xf32>
    %79 = arith.mulf %64, %70 : vector<16x128xf32>
    %80 = arith.mulf %65, %72 : vector<16x128xf32>
    %81 = arith.addf %79, %80 : vector<16x128xf32>
    %82 = arith.mulf %66, %74 : vector<16x128xf32>
    %83 = arith.addf %81, %82 : vector<16x128xf32>
    %cst_31 = arith.constant 0.000000e+00 : f32
    %84 = vector.broadcast %cst_31 : f32 to vector<16x128xf32>
    %85 = arith.maximumf %83, %84 : vector<16x128xf32>
    %86 = arith.mulf %85, %78 : vector<16x128xf32>
    %87 = arith.mulf %86, %86 : vector<16x128xf32>
    %88 = arith.mulf %87, %87 : vector<16x128xf32>
    %89 = arith.mulf %88, %88 : vector<16x128xf32>
    %90 = arith.mulf %89, %89 : vector<16x128xf32>
    %91 = arith.mulf %90, %90 : vector<16x128xf32>
    %92 = arith.mulf %91, %91 : vector<16x128xf32>
    %cst_32 = arith.constant 3.000000e-01 : f32
    %93 = vector.broadcast %cst_32 : f32 to vector<16x128xf32>
    %94 = arith.mulf %93, %49 : vector<16x128xf32>
    %cst_33 = arith.constant 5.000000e-01 : f32
    %95 = vector.broadcast %cst_33 : f32 to vector<16x128xf32>
    %96 = arith.addf %95, %94 : vector<16x128xf32>
    %97 = arith.mulf %96, %7 : vector<16x128xf32>
    %cst_34 = arith.constant 2.000000e-01 : f32
    %98 = vector.broadcast %cst_34 : f32 to vector<16x128xf32>
    %99 = arith.mulf %98, %92 : vector<16x128xf32>
    %100 = arith.addf %97, %99 : vector<16x128xf32>
    %cst_35 = arith.constant 1.000000e+00 : f32
    %101 = vector.broadcast %cst_35 : f32 to vector<16x128xf32>
    %102 = arith.select %14, %100, %101 : vector<16x128xi1>, vector<16x128xf32>
    %c0_36 = arith.constant 0 : index
    %c0_37 = arith.constant 0 : index
    %c0_38 = arith.constant 0 : index
    %103 = vector.load %arg11[%c0_36, %c0_37, %c0_38] : memref<3x16x128xf32, #tpu.memory_space<vmem>>, vector<1x16x128xf32>
    %104 = vector.shape_cast %103 : vector<1x16x128xf32> to vector<16x128xf32>
    %105 = vector.shape_cast %102 : vector<16x128xf32> to vector<1x16x128xf32>
    tpu.vector_store %arg11[%c0_36, %c0_37, %c0_38], %105 {strides = array<i32>} : memref<3x16x128xf32, #tpu.memory_space<vmem>>, vector<1x16x128xf32>,
    %cst_39 = arith.constant 3.000000e-01 : f32
    %106 = vector.broadcast %cst_39 : f32 to vector<16x128xf32>
    %107 = arith.mulf %106, %49 : vector<16x128xf32>
    %cst_40 = arith.constant 5.000000e-01 : f32
    %108 = vector.broadcast %cst_40 : f32 to vector<16x128xf32>
    %109 = arith.addf %108, %107 : vector<16x128xf32>
    %110 = arith.mulf %109, %9 : vector<16x128xf32>
    %cst_41 = arith.constant 2.000000e-01 : f32
    %111 = vector.broadcast %cst_41 : f32 to vector<16x128xf32>
    %112 = arith.mulf %111, %92 : vector<16x128xf32>
    %113 = arith.addf %110, %112 : vector<16x128xf32>
    %cst_42 = arith.constant 1.000000e+00 : f32
    %114 = vector.broadcast %cst_42 : f32 to vector<16x128xf32>
    %115 = arith.select %14, %113, %114 : vector<16x128xi1>, vector<16x128xf32>
    %c1 = arith.constant 1 : index
    %c0_43 = arith.constant 0 : index
    %c0_44 = arith.constant 0 : index
    %116 = vector.load %arg11[%c1, %c0_43, %c0_44] : memref<3x16x128xf32, #tpu.memory_space<vmem>>, vector<1x16x128xf32>
    %117 = vector.shape_cast %116 : vector<1x16x128xf32> to vector<16x128xf32>
    %118 = vector.shape_cast %115 : vector<16x128xf32> to vector<1x16x128xf32>
    tpu.vector_store %arg11[%c1, %c0_43, %c0_44], %118 {strides = array<i32>} : memref<3x16x128xf32, #tpu.memory_space<vmem>>, vector<1x16x128xf32>,
    %cst_45 = arith.constant 3.000000e-01 : f32
    %119 = vector.broadcast %cst_45 : f32 to vector<16x128xf32>
    %120 = arith.mulf %119, %49 : vector<16x128xf32>
    %cst_46 = arith.constant 5.000000e-01 : f32
    %121 = vector.broadcast %cst_46 : f32 to vector<16x128xf32>
    %122 = arith.addf %121, %120 : vector<16x128xf32>
    %123 = arith.mulf %122, %11 : vector<16x128xf32>
    %cst_47 = arith.constant 2.000000e-01 : f32
    %124 = vector.broadcast %cst_47 : f32 to vector<16x128xf32>
    %125 = arith.mulf %124, %92 : vector<16x128xf32>
    %126 = arith.addf %123, %125 : vector<16x128xf32>
    %cst_48 = arith.constant 1.000000e+00 : f32
    %127 = vector.broadcast %cst_48 : f32 to vector<16x128xf32>
    %128 = arith.select %14, %126, %127 : vector<16x128xi1>, vector<16x128xf32>
    %c2 = arith.constant 2 : index
    %c0_49 = arith.constant 0 : index
    %c0_50 = arith.constant 0 : index
    %129 = vector.load %arg11[%c2, %c0_49, %c0_50] : memref<3x16x128xf32, #tpu.memory_space<vmem>>, vector<1x16x128xf32>
    %130 = vector.shape_cast %129 : vector<1x16x128xf32> to vector<16x128xf32>
    %131 = vector.shape_cast %128 : vector<16x128xf32> to vector<1x16x128xf32>
    tpu.vector_store %arg11[%c2, %c0_49, %c0_50], %131 {strides = array<i32>} : memref<3x16x128xf32, #tpu.memory_space<vmem>>, vector<1x16x128xf32>,
    return
  }
  func.func @transform_0(%arg0: i32) -> (i32, i32) {
    %c0_i32 = arith.constant 0 : i32
    %c0_i32_0 = arith.constant 0 : i32
    return %arg0, %c0_i32 : i32, i32
  }
  func.func @transform_1(%arg0: i32) -> (i32, i32) {
    %c0_i32 = arith.constant 0 : i32
    %c0_i32_0 = arith.constant 0 : i32
    return %arg0, %c0_i32 : i32, i32
  }
  func.func @transform_2(%arg0: i32) -> (i32, i32) {
    %c0_i32 = arith.constant 0 : i32
    %c0_i32_0 = arith.constant 0 : i32
    return %arg0, %c0_i32 : i32, i32
  }
  func.func @transform_3(%arg0: i32) -> (i32, i32) {
    %c0_i32 = arith.constant 0 : i32
    %c0_i32_0 = arith.constant 0 : i32
    return %arg0, %c0_i32 : i32, i32
  }
  func.func @transform_4(%arg0: i32) -> (i32, i32) {
    %c0_i32 = arith.constant 0 : i32
    %c0_i32_0 = arith.constant 0 : i32
    return %arg0, %c0_i32 : i32, i32
  }
  func.func @transform_5(%arg0: i32) -> (i32, i32) {
    %c0_i32 = arith.constant 0 : i32
    %c0_i32_0 = arith.constant 0 : i32
    return %arg0, %c0_i32 : i32, i32
  }
  func.func @transform_6(%arg0: i32) -> (i32, i32) {
    %c0_i32 = arith.constant 0 : i32
    %c0_i32_0 = arith.constant 0 : i32
    return %arg0, %c0_i32 : i32, i32
  }
  func.func @transform_7(%arg0: i32) -> (i32, i32) {
    %c0_i32 = arith.constant 0 : i32
    %c0_i32_0 = arith.constant 0 : i32
    return %arg0, %c0_i32 : i32, i32
  }
  func.func @transform_8(%arg0: i32) -> (i32, i32) {
    %c0_i32 = arith.constant 0 : i32
    %c0_i32_0 = arith.constant 0 : i32
    return %arg0, %c0_i32 : i32, i32
  }
  func.func @transform_9(%arg0: i32) -> (i32, i32) {
    %c0_i32 = arith.constant 0 : i32
    %c0_i32_0 = arith.constant 0 : i32
    return %arg0, %c0_i32 : i32, i32
  }
  func.func @transform_10(%arg0: i32) -> (i32, i32, i32) {
    %c0_i32 = arith.constant 0 : i32
    %c0_i32_0 = arith.constant 0 : i32
    %c0_i32_1 = arith.constant 0 : i32
    return %c0_i32, %arg0, %c0_i32_0 : i32, i32, i32
  }
}

</mosaic_0001>

<llo_original>
// kernel: hard_phong_shader.1
$region0: #{hard_phong_shader.1}
  #allocation0 [shape = 'u32[]', space=smem, size = 0x4, offset = 0x4, fixed_abs, tag = 'smem constant byte address 0x4 - core index']
  #allocation1 [shape = 'u32[144,128]{1,0:T(1,128)}', space=vmem, size = 0x12000, scoped, tag = 'internal scratch']
  %s0 = inlined_call_operand.vmem [shape: f32[16,128], index: 0, kind: input, shape index: {}]
  %s1 = inlined_call_operand.vmem [shape: f32[16,128], index: 1, kind: input, shape index: {}]
  %s2 = inlined_call_operand.vmem [shape: f32[16,128], index: 2, kind: input, shape index: {}]
  %s3 = inlined_call_operand.vmem [shape: f32[16,128], index: 3, kind: input, shape index: {}]
  %s4 = inlined_call_operand.vmem [shape: f32[16,128], index: 4, kind: input, shape index: {}]
  %s5 = inlined_call_operand.vmem [shape: f32[16,128], index: 5, kind: input, shape index: {}]
  %s6 = inlined_call_operand.vmem [shape: bf16[16,128], index: 6, kind: input, shape index: {}]
  %s7 = inlined_call_operand.vmem [shape: bf16[16,128], index: 7, kind: input, shape index: {}]
  %s8 = inlined_call_operand.vmem [shape: bf16[16,128], index: 8, kind: input, shape index: {}]
  %s9 = inlined_call_operand.vmem [shape: bf16[16,128], index: 9, kind: input, shape index: {}]
  %s10 = inlined_call_operand.vmem [shape: f32[3,16,128], index: 10, kind: output, shape index: {}]
  %s11 = sld [smem:[#allocation0]]
  $region50: #{hard_phong_shader.1} parent=0
    _
  %s13 = ssub.s32 1, %s11
  %s14 = scalar_select 0, %s13, %s11
  // Predicated region
  $region2: #{hard_phong_shader.1} parent=0 // pred_check
    _
  $region3: #{hard_phong_shader.1} parent=0 // pred_check_branch
    %16 = sbr.rel (0) target = $region5
  $region4: #{hard_phong_shader.1} parent=0 // pred_region
    _
  $region5: #{hard_phong_shader.1} parent=0 // pred_fallthru
    _
  // Predicated region
  $region6: #{hard_phong_shader.1} parent=0 // pred_check
    _
  $region7: #{hard_phong_shader.1} parent=0 // pred_check_branch
    %18 = sbr.rel (0) target = $region9
  $region8: #{hard_phong_shader.1} parent=0 // pred_region
    _
  $region9: #{hard_phong_shader.1} parent=0 // pred_fallthru
    _
  // Predicated region
  $region10: #{hard_phong_shader.1} parent=0 // pred_check
    _
  $region11: #{hard_phong_shader.1} parent=0 // pred_check_branch
    %20 = sbr.rel (0) target = $region13
  $region12: #{hard_phong_shader.1} parent=0 // pred_region
    _
  $region13: #{hard_phong_shader.1} parent=0 // pred_fallthru
    _
  // Predicated region
  $region14: #{hard_phong_shader.1} parent=0 // pred_check
    _
  $region15: #{hard_phong_shader.1} parent=0 // pred_check_branch
    %22 = sbr.rel (0) target = $region17
  $region16: #{hard_phong_shader.1} parent=0 // pred_region
    _
  $region17: #{hard_phong_shader.1} parent=0 // pred_fallthru
    _
  // Predicated region
  $region18: #{hard_phong_shader.1} parent=0 // pred_check
    _
  $region19: #{hard_phong_shader.1} parent=0 // pred_check_branch
    %24 = sbr.rel (0) target = $region21
  $region20: #{hard_phong_shader.1} parent=0 // pred_region
    _
  $region21: #{hard_phong_shader.1} parent=0 // pred_fallthru
    _
  // Predicated region
  $region22: #{hard_phong_shader.1} parent=0 // pred_check
    _
  $region23: #{hard_phong_shader.1} parent=0 // pred_check_branch
    %26 = sbr.rel (0) target = $region25
  $region24: #{hard_phong_shader.1} parent=0 // pred_region
    _
  $region25: #{hard_phong_shader.1} parent=0 // pred_fallthru
    _
  // Predicated region
  $region26: #{hard_phong_shader.1} parent=0 // pred_check
    _
  $region27: #{hard_phong_shader.1} parent=0 // pred_check_branch
    %28 = sbr.rel (0) target = $region29
  $region28: #{hard_phong_shader.1} parent=0 // pred_region
    _
  $region29: #{hard_phong_shader.1} parent=0 // pred_fallthru
    _
  // Predicated region
  $region30: #{hard_phong_shader.1} parent=0 // pred_check
    _
  $region31: #{hard_phong_shader.1} parent=0 // pred_check_branch
    %30 = sbr.rel (0) target = $region33
  $region32: #{hard_phong_shader.1} parent=0 // pred_region
    _
  $region33: #{hard_phong_shader.1} parent=0 // pred_fallthru
    _
  // Predicated region
  $region34: #{hard_phong_shader.1} parent=0 // pred_check
    _
  $region35: #{hard_phong_shader.1} parent=0 // pred_check_branch
    %32 = sbr.rel (0) target = $region37
  $region36: #{hard_phong_shader.1} parent=0 // pred_region
    _
  $region37: #{hard_phong_shader.1} parent=0 // pred_fallthru
    _
  // Predicated region
  $region38: #{hard_phong_shader.1} parent=0 // pred_check
    _
  $region39: #{hard_phong_shader.1} parent=0 // pred_check_branch
    %34 = sbr.rel (0) target = $region41
  $region40: #{hard_phong_shader.1} parent=0 // pred_region
    _
  $region41: #{hard_phong_shader.1} parent=0 // pred_fallthru
    _
  %v38 = vld [vmem:[%s0] sm:$0xff]
  %v39 = vld [vmem:[%s0 + $0x8] sm:$0xff]
  %v40 = vld [vmem:[%s1] sm:$0xff]
  %v41 = vld [vmem:[%s1 + $0x8] sm:$0xff]
  %v42 = vld [vmem:[%s2] sm:$0xff]
  %v43 = vld [vmem:[%s2 + $0x8] sm:$0xff]
  %v44 = vld [vmem:[%s3] sm:$0xff]
  %v45 = vld [vmem:[%s3 + $0x8] sm:$0xff]
  %v46 = vld [vmem:[%s4] sm:$0xff]
  %v47 = vld [vmem:[%s4 + $0x8] sm:$0xff]
  %v48 = vld [vmem:[%s5] sm:$0xff]
  %v49 = vld [vmem:[%s5 + $0x8] sm:$0xff]
  %v50 = vld [vmem:[%s6] sm:$0xf]
  %v51 = vld [vmem:[%s6 + $0x4] sm:$0xf]
  %v52 = vunpack.c.l.bf16 %v50
  %v53 = vunpack.c.l.bf16 %v51
  %v54 = vld [vmem:[%s7] sm:$0xf]
  %v55 = vld [vmem:[%s7 + $0x4] sm:$0xf]
  %v56 = vunpack.c.l.bf16 %v54
  %v57 = vunpack.c.l.bf16 %v55
  %v58 = vld [vmem:[%s8] sm:$0xf]
  %v59 = vld [vmem:[%s8 + $0x4] sm:$0xf]
  %v60 = vunpack.c.l.bf16 %v58
  %v61 = vunpack.c.l.bf16 %v59
  %v62 = vld [vmem:[%s9] sm:$0xf]
  %v63 = vld [vmem:[%s9 + $0x4] sm:$0xf]
  %vm64 = vcmp.gt.bf16.partialorder %v62, 0
  %vm65 = vcmp.gt.bf16.partialorder %v63, 0
  %v66 = vsub.f32 0.0, %v38
  %v67 = vsub.f32 0.0, %v39
  %v68 = vsub.f32 1.0, %v40
  %v69 = vsub.f32 1.0, %v41
  %v70 = vsub.f32 0.0, %v42
  %v71 = vsub.f32 0.0, %v43
  %v72 = vmul.f32 %v66, %v66
  %v73 = vmul.f32 %v67, %v67
  %v74 = vmul.f32 %v68, %v68
  %v75 = vmul.f32 %v69, %v69
  %v76 = vadd.f32 %v72, %v74
  %v77 = vadd.f32 %v73, %v75
  %v78 = vmul.f32 %v70, %v70
  %v79 = vmul.f32 %v71, %v71
  %v80 = vadd.f32 %v76, %v78
  %v81 = vadd.f32 %v77, %v79
  %v82 = vmax.f32 %v80, 1e-12
  %v83 = vmax.f32 %v81, 1e-12
  %v84 = vrsqrt.pop %v82
  %v85 = vrsqrt.pop %v83
  %v86 = vmul.f32 %v66, %v84
  %v87 = vmul.f32 %v67, %v85
  %v88 = vmul.f32 %v68, %v84
  %v89 = vmul.f32 %v69, %v85
  %v90 = vmul.f32 %v70, %v84
  %v91 = vmul.f32 %v71, %v85
  %v92 = vmul.f32 %v44, %v44
  %v93 = vmul.f32 %v45, %v45
  %v94 = vmul.f32 %v46, %v46
  %v95 = vmul.f32 %v47, %v47
  %v96 = vadd.f32 %v92, %v94
  %v97 = vadd.f32 %v93, %v95
  %v98 = vmul.f32 %v48, %v48
  %v99 = vmul.f32 %v49, %v49
  %v100 = vadd.f32 %v96, %v98
  %v101 = vadd.f32 %v97, %v99
  %v102 = vmax.f32 %v100, 1e-12
  %v103 = vmax.f32 %v101, 1e-12
  %v104 = vrsqrt.pop %v102
  %v105 = vrsqrt.pop %v103
  %v106 = vmul.f32 %v44, %v104
  %v107 = vmul.f32 %v45, %v105
  %v108 = vmul.f32 %v46, %v104
  %v109 = vmul.f32 %v47, %v105
  %v110 = vmul.f32 %v48, %v104
  %v111 = vmul.f32 %v49, %v105
  %v112 = vmul.f32 %v106, %v86
  %v113 = vmul.f32 %v107, %v87
  %v114 = vmul.f32 %v108, %v88
  %v115 = vmul.f32 %v109, %v89
  %v116 = vadd.f32 %v112, %v114
  %v117 = vadd.f32 %v113, %v115
  %v118 = vmul.f32 %v110, %v90
  %v119 = vmul.f32 %v111, %v91
  %v120 = vadd.f32 %v116, %v118
  %v121 = vadd.f32 %v117, %v119
  %v122 = vmax.f32 %v120, 0.0
  %v123 = vmax.f32 %v121, 0.0
  %v124 = vsub.f32 0.0, %v40
  %v125 = vsub.f32 0.0, %v41
  %v126 = vsub.f32 5.0, %v42
  %v127 = vsub.f32 5.0, %v43
  %v128 = vmul.f32 %v124, %v124
  %v129 = vmul.f32 %v125, %v125
  %v130 = vadd.f32 %v72, %v128
  %v131 = vadd.f32 %v73, %v129
  %v132 = vmul.f32 %v126, %v126
  %v133 = vmul.f32 %v127, %v127
  %v134 = vadd.f32 %v130, %v132
  %v135 = vadd.f32 %v131, %v133
  %v136 = vmax.f32 %v134, 1e-12
  %v137 = vmax.f32 %v135, 1e-12
  %v138 = vrsqrt.pop %v136
  %v139 = vrsqrt.pop %v137
  %v140 = vmul.f32 %v66, %v138
  %v141 = vmul.f32 %v67, %v139
  %v142 = vmul.f32 %v124, %v138
  %v143 = vmul.f32 %v125, %v139
  %v144 = vmul.f32 %v126, %v138
  %v145 = vmul.f32 %v127, %v139
  %v146 = vmul.f32 %v120, 2.0
  %v147 = vmul.f32 %v121, 2.0
  %v148 = vmul.f32 %v146, %v106
  %v149 = vmul.f32 %v147, %v107
  %v150 = vsub.f32 %v148, %v86
  %v151 = vsub.f32 %v149, %v87
  %v152 = vmul.f32 %v146, %v108
  %v153 = vmul.f32 %v147, %v109
  %v154 = vsub.f32 %v152, %v88
  %v155 = vsub.f32 %v153, %v89
  %v156 = vmul.f32 %v146, %v110
  %v157 = vmul.f32 %v147, %v111
  %v158 = vsub.f32 %v156, %v90
  %v159 = vsub.f32 %v157, %v91
  %vm160 = vcmp.gt.f32.partialorder %v120, 0.0
  %vm161 = vcmp.gt.f32.partialorder %v121, 0.0
  %v162 = vsel %vm160, 1, 0
  %v163 = vsel %vm161, 1, 0
  %v164 = vcvt.s32.f32 %v162
  %v165 = vcvt.s32.f32 %v163
  %v166 = vmul.f32 %v140, %v150
  %v167 = vmul.f32 %v141, %v151
  %v168 = vmul.f32 %v142, %v154
  %v169 = vmul.f32 %v143, %v155
  %v170 = vadd.f32 %v166, %v168
  %v171 = vadd.f32 %v167, %v169
  %v172 = vmul.f32 %v144, %v158
  %v173 = vmul.f32 %v145, %v159
  %v174 = vadd.f32 %v170, %v172
  %v175 = vadd.f32 %v171, %v173
  %v176 = vmax.f32 %v174, 0.0
  %v177 = vmax.f32 %v175, 0.0
  %v178 = vmul.f32 %v176, %v164
  %v179 = vmul.f32 %v177, %v165
  %v180 = vmul.f32 %v178, %v178
  %v181 = vmul.f32 %v179, %v179
  %v182 = vmul.f32 %v180, %v180
  %v183 = vmul.f32 %v181, %v181
  %v184 = vmul.f32 %v182, %v182
  %v185 = vmul.f32 %v183, %v183
  %v186 = vmul.f32 %v184, %v184
  %v187 = vmul.f32 %v185, %v185
  %v188 = vmul.f32 %v186, %v186
  %v189 = vmul.f32 %v187, %v187
  %v190 = vmul.f32 %v188, %v188
  %v191 = vmul.f32 %v189, %v189
  %v192 = vmul.f32 %v122, 0.3
  %v193 = vmul.f32 %v123, 0.3
  %v194 = vadd.f32 %v192, 0.5
  %v195 = vadd.f32 %v193, 0.5
  %v196 = vmul.f32 %v194, %v52
  %v197 = vmul.f32 %v195, %v53
  %v198 = vmul.f32 %v190, 0.2
  %v199 = vmul.f32 %v191, 0.2
  %v200 = vadd.f32 %v196, %v198
  %v201 = vadd.f32 %v197, %v199
  %v202 = vsel %vm64, 65537, 0
  %v203 = vsel %vm65, 65537, 0
  %v204 = vunpack.c.l.b16 %v202
  %v205 = vunpack.c.l.b16 %v203
  %vm206 = vcmp.ne.s32.totalorder %v204, 0
  %vm207 = vcmp.ne.s32.totalorder %v205, 0
  %v208 = vsel %vm206, %v200, 1.0
  %v209 = vsel %vm207, %v201, 1.0
  %210 = vst [vmem:[%s10] sm:$0xff] %v208
  %211 = vst [vmem:[%s10 + $0x8] sm:$0xff] %v209
  %v212 = vmul.f32 %v194, %v56
  %v213 = vmul.f32 %v195, %v57
  %v214 = vadd.f32 %v212, %v198
  %v215 = vadd.f32 %v213, %v199
  %v216 = vsel %vm206, %v214, 1.0
  %v217 = vsel %vm207, %v215, 1.0
  %s218 = scalar_lea.vmem %s10, 16
  %219 = vst [vmem:[%s218] sm:$0xff] %v216
  %220 = vst [vmem:[%s218 + $0x8] sm:$0xff] %v217
  %v221 = vmul.f32 %v194, %v60
  %v222 = vmul.f32 %v195, %v61
  %v223 = vadd.f32 %v221, %v198
  %v224 = vadd.f32 %v222, %v199
  %v225 = vsel %vm206, %v223, 1.0
  %v226 = vsel %vm207, %v224, 1.0
  %s227 = scalar_lea.vmem %s10, 32
  %228 = vst [vmem:[%s227] sm:$0xff] %v225
  %229 = vst [vmem:[%s227 + $0x8] sm:$0xff] %v226
  // Predicated region
  $region42: #{hard_phong_shader.1} parent=0 // pred_check
    _
  $region43: #{hard_phong_shader.1} parent=0 // pred_check_branch
    %231 = sbr.rel (0) target = $region45
  $region44: #{hard_phong_shader.1} parent=0 // pred_region
    _
  $region45: #{hard_phong_shader.1} parent=0 // pred_fallthru
    _
  // Predicated region
  $region46: #{hard_phong_shader.1} parent=0 // pred_check
    _
  $region47: #{hard_phong_shader.1} parent=0 // pred_check_branch
    %233 = sbr.rel (0) target = $region49
  $region48: #{hard_phong_shader.1} parent=0 // pred_region
    _
  $region49: #{hard_phong_shader.1} parent=0 // pred_fallthru
    _

</llo_original>
